<compile_context>
chip_gen: v7x
topology: tpu7x:2x2x1
jax: 0.10.0
libtpu: 0.0.40
codegen_flags: <defaults>
</compile_context>

<pallas_src>
import math

import jax
import jax.numpy as jnp
from jax.experimental import pallas as pl
from jax.experimental.pallas import tpu as pltpu

# Small, module-consistent hyperparameters (d_model divisible by num_heads).
D_MODEL = 32
NUM_HEADS = 4
HEAD_DIM = D_MODEL // NUM_HEADS
NUM_CLASSES = 2
LENGTH_MAX = 8
BATCH = 2
LANES = 128                       # lane-dense logits width (>= NUM_CLASSES)


def mha_classifier_kernel(x_ref, ws_ref, bs_ref, wv_ref, bv_ref,
                          sc_ref, vc_ref, mv_ref, woc_ref, boc_ref, out_ref):
    """One grid step: whole batch, class-token query only, no per-head slicing."""
    f32 = jnp.float32
    x = x_ref[...]                                     # (B*L, D)   bag rows

    # Scores of the constant class-token query against every bag key: Q proj, K proj,
    # per-head contraction and scale are all folded offline into ws (D, H).
    s_x = jnp.dot(x, ws_ref[...], preferred_element_type=f32) + bs_ref[...]   # (B*L, H)
    # Value projection of the bag rows.
    v_x = jnp.dot(x, wv_ref[...], preferred_element_type=f32) + bv_ref[...]   # (B*L, D)

    s_c = sc_ref[...]                                  # (1, H) class-token-key scores (const)
    v_c = vc_ref[...]                                  # (1, D) class-token value row  (const)
    mv = mv_ref[...]                                   # (H, D) head -> V-lane broadcast mask

    # Per-batch, per-head softmax over the S = L+1 keys and the attention context of
    # the class-token query.  B is tiny, so this is a static unrolled loop of pure
    # 2-D ops; sublane slices are tile-aligned (L == 8) and the class-token key is
    # folded in analytically (no score / value concatenation).
    ctx_rows = []
    for b in range(BATCH):
        lo = b * LENGTH_MAX
        s_b = s_x[lo:lo + LENGTH_MAX, :]               # (L, H)
        v_b = v_x[lo:lo + LENGTH_MAX, :]               # (L, D)
        m_b = jnp.maximum(jnp.max(s_b, axis=0, keepdims=True), s_c)              # (1, H)
        e_b = jnp.exp(s_b - m_b)                                                  # (L, H)
        e_c = jnp.exp(s_c - m_b)                                                  # (1, H)
        inv = pl.reciprocal(jnp.sum(e_b, axis=0, keepdims=True) + e_c,
                            approx=True)                                          # (1, H)
        p_b = e_b * inv                                                           # (L, H)
        p_c = e_c * inv                                                           # (1, H)
        # Broadcast per-head probs across their V lanes (constant mask matmul),
        # weight the value rows, reduce over keys.
        ctx_b = jnp.sum(jnp.dot(p_b, mv, preferred_element_type=f32) * v_b,
                        axis=0, keepdims=True)                                    # (1, D)
        ctx_b = ctx_b + jnp.dot(p_c, mv, preferred_element_type=f32) * v_c        # (1, D)
        ctx_rows.append(ctx_b)
    ctx = jnp.concatenate(ctx_rows, axis=0)            # (B, D)

    # out_proj and classifier folded into one lane-dense (D, 128) weight -> unmasked
    # 128-wide store of the padded logits.
    out_ref[...] = jnp.dot(ctx, woc_ref[...], preferred_element_type=f32) + boc_ref[...]


def _fold_params(p):
    """Parameter-only preprocessing (would be done offline in a real deployment)."""
    f32 = jnp.float32
    cls = p["class_token"].reshape(1, D_MODEL)
    scale = 1.0 / math.sqrt(HEAD_DIM)

    d = jnp.arange(D_MODEL)
    h = jnp.arange(NUM_HEADS)
    mhead = (d[:, None] // HEAD_DIM == h[None, :]).astype(f32)        # (D, H) head membership
    mv = (h[:, None] == d[None, :] // HEAD_DIM).astype(f32)           # (H, D) prob -> V lanes

    # Constant class-token query folded (with the scale) into the K projection.
    q0 = (cls @ p["wq"] + p["bq"]).reshape(D_MODEL)                   # (D,)
    wsel = (q0[:, None] * mhead) * scale                              # (D, H)
    w_score = p["wk"] @ wsel                                          # (D, H)
    b_score = p["bk"] @ wsel                                          # (1, H)
    s_c = (cls @ p["wk"] + p["bk"]) @ wsel                            # (1, H) class-token key
    v_c = cls @ p["wv"] + p["bv"]                                     # (1, D) class-token value

    # out_proj folded into the classifier; zero-padded to 128 lanes for a dense store.
    w_oc = p["wo"] @ p["wc"]                                          # (D, C)
    b_oc = p["bo"] @ p["wc"] + p["bc"]                                # (1, C)
    w_oc_pad = jnp.zeros((D_MODEL, LANES), f32).at[:, :NUM_CLASSES].set(w_oc)
    b_oc_pad = jnp.zeros((1, LANES), f32).at[:, :NUM_CLASSES].set(b_oc)

    return (w_score, b_score, p["wv"], p["bv"], s_c, v_c, mv, w_oc_pad, b_oc_pad)


@jax.jit
def mha_classifier(x, params):
    B, L, D = x.shape
    assert D == D_MODEL and L == LENGTH_MAX and B == BATCH
    folded = _fold_params(params)
    x2d = x.reshape(B * L, D)                  # free metadata reshape, no HBM copy

    def full(shape):
        n = len(shape)
        return pl.BlockSpec(shape, lambda i, n=n: (0,) * n)

    in_shapes = [
        (B * L, D),                            # x rows (no (B,S,D) concat in HBM)
        (D, NUM_HEADS), (1, NUM_HEADS),        # folded score projection
        (D, D), (1, D),                        # value projection
        (1, NUM_HEADS), (1, D),                # class-token key score / value (const)
        (NUM_HEADS, D),                        # head -> V-lane broadcast mask
        (D, LANES), (1, LANES),                # folded out_proj+classifier (lane-dense)
    ]
    logits_pad = pl.pallas_call(
        mha_classifier_kernel,
        out_shape=jax.ShapeDtypeStruct((B, LANES), jnp.float32),
        grid=(1,),                             # single step: whole batch at once
        in_specs=[full(s) for s in in_shapes],
        out_specs=full((B, LANES)),
        compiler_params=pltpu.CompilerParams(dimension_semantics=("arbitrary",)),
    )(x2d, *folded)

    return logits_pad[:, :NUM_CLASSES]         # (B, num_classes)


def reference(x, p):
    """Pure-JAX mirror of the PyTorch forward pass (for verification)."""
    B, L, D = x.shape
    cls_tok = jnp.broadcast_to(p["class_token"], (B, 1, D))
    xc = jnp.concatenate([cls_tok, x], axis=1)      # (B, S, D)
    q = xc @ p["wq"] + p["bq"]
    k = xc @ p["wk"] + p["bk"]
    v = xc @ p["wv"] + p["bv"]
    split = lambda t: t.reshape(B, L + 1, NUM_HEADS, HEAD_DIM).transpose(0, 2, 1, 3)
    qh, kh, vh = split(q), split(k), split(v)
    scores = jnp.einsum("bhqd,bhkd->bhqk", qh, kh) / math.sqrt(HEAD_DIM)
    probs = jax.nn.softmax(scores, axis=-1)
    o = jnp.einsum("bhqk,bhkd->bhqd", probs, vh)
    o = o.transpose(0, 2, 1, 3).reshape(B, L + 1, D)
    out = o @ p["wo"] + p["bo"]
    return out[:, 0] @ p["wc"] + p["bc"]


def init_params(key):
    ks = jax.random.split(key, 11)
    scale = 0.05
    return {
        "wq": scale * jax.random.normal(ks[0], (D_MODEL, D_MODEL), jnp.float32),
        "bq": scale * jax.random.normal(ks[1], (1, D_MODEL), jnp.float32),
        "wk": scale * jax.random.normal(ks[2], (D_MODEL, D_MODEL), jnp.float32),
        "bk": scale * jax.random.normal(ks[3], (1, D_MODEL), jnp.float32),
        "wv": scale * jax.random.normal(ks[4], (D_MODEL, D_MODEL), jnp.float32),
        "bv": scale * jax.random.normal(ks[5], (1, D_MODEL), jnp.float32),
        "wo": scale * jax.random.normal(ks[6], (D_MODEL, D_MODEL), jnp.float32),
        "bo": scale * jax.random.normal(ks[7], (1, D_MODEL), jnp.float32),
        "wc": scale * jax.random.normal(ks[8], (D_MODEL, NUM_CLASSES), jnp.float32),
        "bc": scale * jax.random.normal(ks[9], (1, NUM_CLASSES), jnp.float32),
        "class_token": jax.random.normal(ks[10], (1, 1, D_MODEL), jnp.float32),
    }


if __name__ == "__main__":
    key = jax.random.PRNGKey(0)
    kx, kp = jax.random.split(key)
    x = jax.random.normal(kx, (BATCH, LENGTH_MAX, D_MODEL), jnp.float32)
    params = init_params(kp)

    logits = jax.block_until_ready(mha_classifier(x, params))
    ref = jax.block_until_ready(reference(x, params))

    assert logits.shape == (BATCH, NUM_CLASSES)
    # Tolerance accommodates the approximate (EUP) reciprocal in the softmax; the
    # remaining math is f32 with f32 MXU accumulation.
    assert jnp.allclose(logits, ref, atol=2e-3, rtol=1e-2), (logits, ref)
    print("KERNEL_OK")
</pallas_src>

<mosaic_0001>
module attributes {stable_mosaic.version = 11 : i64} {
  func.func @mha_classifier_kernel(%arg0: i32, %arg1: memref<16x32xf32, #tpu.memory_space<vmem>>, %arg2: memref<32x4xf32, #tpu.memory_space<vmem>>, %arg3: memref<1x4xf32, #tpu.memory_space<vmem>>, %arg4: memref<32x32xf32, #tpu.memory_space<vmem>>, %arg5: memref<1x32xf32, #tpu.memory_space<vmem>>, %arg6: memref<1x4xf32, #tpu.memory_space<vmem>>, %arg7: memref<1x32xf32, #tpu.memory_space<vmem>>, %arg8: memref<4x32xf32, #tpu.memory_space<vmem>>, %arg9: memref<32x128xf32, #tpu.memory_space<vmem>>, %arg10: memref<1x128xf32, #tpu.memory_space<vmem>>, %arg11: memref<2x128xf32, #tpu.memory_space<vmem>>) attributes {dimension_semantics = [#tpu.dimension_semantics<arbitrary>], iteration_bounds = array<i64: 1>, scalar_prefetch = 0 : i64, scratch_operands = 0 : i64, tpu.core_type = #tpu.core_type<tc>, window_params = [{pipeline_mode = #tpu.pipeline_mode<synchronous>, transform_indices = @transform_0, window_bounds = array<i64: 16, 32>}, {pipeline_mode = #tpu.pipeline_mode<synchronous>, transform_indices = @transform_1, window_bounds = array<i64: 32, 4>}, {pipeline_mode = #tpu.pipeline_mode<synchronous>, transform_indices = @transform_2, window_bounds = array<i64: 1, 4>}, {pipeline_mode = #tpu.pipeline_mode<synchronous>, transform_indices = @transform_3, window_bounds = array<i64: 32, 32>}, {pipeline_mode = #tpu.pipeline_mode<synchronous>, transform_indices = @transform_4, window_bounds = array<i64: 1, 32>}, {pipeline_mode = #tpu.pipeline_mode<synchronous>, transform_indices = @transform_5, window_bounds = array<i64: 1, 4>}, {pipeline_mode = #tpu.pipeline_mode<synchronous>, transform_indices = @transform_6, window_bounds = array<i64: 1, 32>}, {pipeline_mode = #tpu.pipeline_mode<synchronous>, transform_indices = @transform_7, window_bounds = array<i64: 4, 32>}, {pipeline_mode = #tpu.pipeline_mode<synchronous>, transform_indices = @transform_8, window_bounds = array<i64: 32, 128>}, {pipeline_mode = #tpu.pipeline_mode<synchronous>, transform_indices = @transform_9, window_bounds = array<i64: 1, 128>}, {pipeline_mode = #tpu.pipeline_mode<synchronous>, transform_indices = @transform_10, window_bounds = array<i64: 2, 128>}]} {
    %c0 = arith.constant 0 : index
    %c0_0 = arith.constant 0 : index
    %0 = vector.load %arg1[%c0, %c0_0] : memref<16x32xf32, #tpu.memory_space<vmem>>, vector<16x32xf32>
    %c0_1 = arith.constant 0 : index
    %c0_2 = arith.constant 0 : index
    %1 = vector.load %arg2[%c0_1, %c0_2] : memref<32x4xf32, #tpu.memory_space<vmem>>, vector<32x4xf32>
    %cst = arith.constant dense<0.000000e+00> : vector<16x4xf32>
    %2 = tpu.matmul %0, %1, %cst {dimension_numbers = #tpu.dot_dimension_numbers<[1], [0], [0], [1], [0, 0, 1, 1], [], []>} : vector<16x32xf32>, vector<32x4xf32>, vector<16x4xf32> -> vector<16x4xf32>
    %c0_3 = arith.constant 0 : index
    %c0_4 = arith.constant 0 : index
    %3 = vector.load %arg3[%c0_3, %c0_4] : memref<1x4xf32, #tpu.memory_space<vmem>>, vector<1x4xf32>
    %4 = vector.broadcast %3 : vector<1x4xf32> to vector<16x4xf32>
    %5 = arith.addf %2, %4 : vector<16x4xf32>
    %c0_5 = arith.constant 0 : index
    %c0_6 = arith.constant 0 : index
    %6 = vector.load %arg4[%c0_5, %c0_6] : memref<32x32xf32, #tpu.memory_space<vmem>>, vector<32x32xf32>
    %cst_7 = arith.constant dense<0.000000e+00> : vector<16x32xf32>
    %7 = tpu.matmul %0, %6, %cst_7 {dimension_numbers = #tpu.dot_dimension_numbers<[1], [0], [0], [1], [0, 0, 1, 1], [], []>} : vector<16x32xf32>, vector<32x32xf32>, vector<16x32xf32> -> vector<16x32xf32>
    %c0_8 = arith.constant 0 : index
    %c0_9 = arith.constant 0 : index
    %8 = vector.load %arg5[%c0_8, %c0_9] : memref<1x32xf32, #tpu.memory_space<vmem>>, vector<1x32xf32>
    %9 = vector.broadcast %8 : vector<1x32xf32> to vector<16x32xf32>
    %10 = arith.addf %7, %9 : vector<16x32xf32>
    %c0_10 = arith.constant 0 : index
    %c0_11 = arith.constant 0 : index
    %11 = vector.load %arg6[%c0_10, %c0_11] : memref<1x4xf32, #tpu.memory_space<vmem>>, vector<1x4xf32>
    %c0_12 = arith.constant 0 : index
    %c0_13 = arith.constant 0 : index
    %12 = vector.load %arg7[%c0_12, %c0_13] : memref<1x32xf32, #tpu.memory_space<vmem>>, vector<1x32xf32>
    %c0_14 = arith.constant 0 : index
    %c0_15 = arith.constant 0 : index
    %13 = vector.load %arg8[%c0_14, %c0_15] : memref<4x32xf32, #tpu.memory_space<vmem>>, vector<4x32xf32>
    %14 = vector.extract_strided_slice %5 {offsets = [0, 0], sizes = [8, 4], strides = [1, 1]} : vector<16x4xf32> to vector<8x4xf32>
    %15 = vector.extract_strided_slice %10 {offsets = [0, 0], sizes = [8, 32], strides = [1, 1]} : vector<16x32xf32> to vector<8x32xf32>
    %cst_16 = arith.constant dense<0xFF800000> : vector<4xf32>
    %16 = vector.multi_reduction <maximumf>, %14, %cst_16 [0] : vector<8x4xf32> to vector<4xf32>
    %17 = vector.shape_cast %16 : vector<4xf32> to vector<1x4xf32>
    %18 = arith.maximumf %17, %11 : vector<1x4xf32>
    %19 = vector.broadcast %18 : vector<1x4xf32> to vector<8x4xf32>
    %20 = arith.subf %14, %19 : vector<8x4xf32>
    %21 = math.exp %20 : vector<8x4xf32>
    %22 = arith.subf %11, %18 : vector<1x4xf32>
    %23 = math.exp %22 : vector<1x4xf32>
    %cst_17 = arith.constant dense<0.000000e+00> : vector<4xf32>
    %24 = vector.multi_reduction <add>, %21, %cst_17 [0] : vector<8x4xf32> to vector<4xf32>
    %25 = vector.shape_cast %24 : vector<4xf32> to vector<1x4xf32>
    %26 = arith.addf %25, %23 : vector<1x4xf32>
    %27 = tpu.reciprocal %26 {approx = true} : vector<1x4xf32> -> vector<1x4xf32>
    %28 = vector.broadcast %27 : vector<1x4xf32> to vector<8x4xf32>
    %29 = arith.mulf %21, %28 : vector<8x4xf32>
    %30 = arith.mulf %23, %27 : vector<1x4xf32>
    %cst_18 = arith.constant dense<0.000000e+00> : vector<8x32xf32>
    %31 = tpu.matmul %29, %13, %cst_18 {dimension_numbers = #tpu.dot_dimension_numbers<[1], [0], [0], [1], [0, 0, 1, 1], [], []>} : vector<8x4xf32>, vector<4x32xf32>, vector<8x32xf32> -> vector<8x32xf32>
    %32 = arith.mulf %31, %15 : vector<8x32xf32>
    %cst_19 = arith.constant dense<0.000000e+00> : vector<32xf32>
    %33 = vector.multi_reduction <add>, %32, %cst_19 [0] : vector<8x32xf32> to vector<32xf32>
    %34 = vector.shape_cast %33 : vector<32xf32> to vector<1x32xf32>
    %cst_20 = arith.constant dense<0.000000e+00> : vector<1x32xf32>
    %35 = tpu.matmul %30, %13, %cst_20 {dimension_numbers = #tpu.dot_dimension_numbers<[1], [0], [0], [1], [0, 0, 1, 1], [], []>} : vector<1x4xf32>, vector<4x32xf32>, vector<1x32xf32> -> vector<1x32xf32>
    %36 = arith.mulf %35, %12 : vector<1x32xf32>
    %37 = arith.addf %34, %36 : vector<1x32xf32>
    %38 = vector.extract_strided_slice %5 {offsets = [8, 0], sizes = [8, 4], strides = [1, 1]} : vector<16x4xf32> to vector<8x4xf32>
    %39 = vector.extract_strided_slice %10 {offsets = [8, 0], sizes = [8, 32], strides = [1, 1]} : vector<16x32xf32> to vector<8x32xf32>
    %cst_21 = arith.constant dense<0xFF800000> : vector<4xf32>
    %40 = vector.multi_reduction <maximumf>, %38, %cst_21 [0] : vector<8x4xf32> to vector<4xf32>
    %41 = vector.shape_cast %40 : vector<4xf32> to vector<1x4xf32>
    %42 = arith.maximumf %41, %11 : vector<1x4xf32>
    %43 = vector.broadcast %42 : vector<1x4xf32> to vector<8x4xf32>
    %44 = arith.subf %38, %43 : vector<8x4xf32>
    %45 = math.exp %44 : vector<8x4xf32>
    %46 = arith.subf %11, %42 : vector<1x4xf32>
    %47 = math.exp %46 : vector<1x4xf32>
    %cst_22 = arith.constant dense<0.000000e+00> : vector<4xf32>
    %48 = vector.multi_reduction <add>, %45, %cst_22 [0] : vector<8x4xf32> to vector<4xf32>
    %49 = vector.shape_cast %48 : vector<4xf32> to vector<1x4xf32>
    %50 = arith.addf %49, %47 : vector<1x4xf32>
    %51 = tpu.reciprocal %50 {approx = true} : vector<1x4xf32> -> vector<1x4xf32>
    %52 = vector.broadcast %51 : vector<1x4xf32> to vector<8x4xf32>
    %53 = arith.mulf %45, %52 : vector<8x4xf32>
    %54 = arith.mulf %47, %51 : vector<1x4xf32>
    %cst_23 = arith.constant dense<0.000000e+00> : vector<8x32xf32>
    %55 = tpu.matmul %53, %13, %cst_23 {dimension_numbers = #tpu.dot_dimension_numbers<[1], [0], [0], [1], [0, 0, 1, 1], [], []>} : vector<8x4xf32>, vector<4x32xf32>, vector<8x32xf32> -> vector<8x32xf32>
    %56 = arith.mulf %55, %39 : vector<8x32xf32>
    %cst_24 = arith.constant dense<0.000000e+00> : vector<32xf32>
    %57 = vector.multi_reduction <add>, %56, %cst_24 [0] : vector<8x32xf32> to vector<32xf32>
    %58 = vector.shape_cast %57 : vector<32xf32> to vector<1x32xf32>
    %cst_25 = arith.constant dense<0.000000e+00> : vector<1x32xf32>
    %59 = tpu.matmul %54, %13, %cst_25 {dimension_numbers = #tpu.dot_dimension_numbers<[1], [0], [0], [1], [0, 0, 1, 1], [], []>} : vector<1x4xf32>, vector<4x32xf32>, vector<1x32xf32> -> vector<1x32xf32>
    %60 = arith.mulf %59, %12 : vector<1x32xf32>
    %61 = arith.addf %58, %60 : vector<1x32xf32>
    %62 = tpu.concatenate %37, %61 in 0 : vector<1x32xf32>, vector<1x32xf32> -> vector<2x32xf32>
    %c0_26 = arith.constant 0 : index
    %c0_27 = arith.constant 0 : index
    %63 = vector.load %arg9[%c0_26, %c0_27] : memref<32x128xf32, #tpu.memory_space<vmem>>, vector<32x128xf32>
    %cst_28 = arith.constant dense<0.000000e+00> : vector<2x128xf32>
    %64 = tpu.matmul %62, %63, %cst_28 {dimension_numbers = #tpu.dot_dimension_numbers<[1], [0], [0], [1], [0, 0, 1, 1], [], []>} : vector<2x32xf32>, vector<32x128xf32>, vector<2x128xf32> -> vector<2x128xf32>
    %c0_29 = arith.constant 0 : index
    %c0_30 = arith.constant 0 : index
    %65 = vector.load %arg10[%c0_29, %c0_30] : memref<1x128xf32, #tpu.memory_space<vmem>>, vector<1x128xf32>
    %66 = vector.broadcast %65 : vector<1x128xf32> to vector<2x128xf32>
    %67 = arith.addf %64, %66 : vector<2x128xf32>
    %c0_31 = arith.constant 0 : index
    %c0_32 = arith.constant 0 : index
    %68 = vector.load %arg11[%c0_31, %c0_32] : memref<2x128xf32, #tpu.memory_space<vmem>>, vector<2x128xf32>
    tpu.vector_store %arg11[%c0_31, %c0_32], %67 {strides = array<i32>} : memref<2x128xf32, #tpu.memory_space<vmem>>, vector<2x128xf32>,
    return
  }
  func.func @transform_0(%arg0: i32) -> (i32, i32) {
    %c0_i32 = arith.constant 0 : i32
    %c0_i32_0 = arith.constant 0 : i32
    %c0_i32_1 = arith.constant 0 : i32
    return %c0_i32, %c0_i32_0 : i32, i32
  }
  func.func @transform_1(%arg0: i32) -> (i32, i32) {
    %c0_i32 = arith.constant 0 : i32
    %c0_i32_0 = arith.constant 0 : i32
    %c0_i32_1 = arith.constant 0 : i32
    return %c0_i32, %c0_i32_0 : i32, i32
  }
  func.func @transform_2(%arg0: i32) -> (i32, i32) {
    %c0_i32 = arith.constant 0 : i32
    %c0_i32_0 = arith.constant 0 : i32
    %c0_i32_1 = arith.constant 0 : i32
    return %c0_i32, %c0_i32_0 : i32, i32
  }
  func.func @transform_3(%arg0: i32) -> (i32, i32) {
    %c0_i32 = arith.constant 0 : i32
    %c0_i32_0 = arith.constant 0 : i32
    %c0_i32_1 = arith.constant 0 : i32
    return %c0_i32, %c0_i32_0 : i32, i32
  }
  func.func @transform_4(%arg0: i32) -> (i32, i32) {
    %c0_i32 = arith.constant 0 : i32
    %c0_i32_0 = arith.constant 0 : i32
    %c0_i32_1 = arith.constant 0 : i32
    return %c0_i32, %c0_i32_0 : i32, i32
  }
  func.func @transform_5(%arg0: i32) -> (i32, i32) {
    %c0_i32 = arith.constant 0 : i32
    %c0_i32_0 = arith.constant 0 : i32
    %c0_i32_1 = arith.constant 0 : i32
    return %c0_i32, %c0_i32_0 : i32, i32
  }
  func.func @transform_6(%arg0: i32) -> (i32, i32) {
    %c0_i32 = arith.constant 0 : i32
    %c0_i32_0 = arith.constant 0 : i32
    %c0_i32_1 = arith.constant 0 : i32
    return %c0_i32, %c0_i32_0 : i32, i32
  }
  func.func @transform_7(%arg0: i32) -> (i32, i32) {
    %c0_i32 = arith.constant 0 : i32
    %c0_i32_0 = arith.constant 0 : i32
    %c0_i32_1 = arith.constant 0 : i32
    return %c0_i32, %c0_i32_0 : i32, i32
  }
  func.func @transform_8(%arg0: i32) -> (i32, i32) {
    %c0_i32 = arith.constant 0 : i32
    %c0_i32_0 = arith.constant 0 : i32
    %c0_i32_1 = arith.constant 0 : i32
    return %c0_i32, %c0_i32_0 : i32, i32
  }
  func.func @transform_9(%arg0: i32) -> (i32, i32) {
    %c0_i32 = arith.constant 0 : i32
    %c0_i32_0 = arith.constant 0 : i32
    %c0_i32_1 = arith.constant 0 : i32
    return %c0_i32, %c0_i32_0 : i32, i32
  }
  func.func @transform_10(%arg0: i32) -> (i32, i32) {
    %c0_i32 = arith.constant 0 : i32
    %c0_i32_0 = arith.constant 0 : i32
    %c0_i32_1 = arith.constant 0 : i32
    return %c0_i32, %c0_i32_0 : i32, i32
  }
}

</mosaic_0001>

<llo_original>
// kernel: mha_classifier.1
$region0: #{mha_classifier.1}
  #allocation0 [shape = 'u32[]', space=smem, size = 0x4, offset = 0x4, fixed_abs, tag = 'smem constant byte address 0x4 - core index']
  #allocation1 [shape = 'u32[144,128]{1,0:T(1,128)}', space=vmem, size = 0x12000, scoped, tag = 'internal scratch']
  %s0 = inlined_call_operand.vmem [shape: f32[16,32], index: 0, kind: input, shape index: {}]
  %s1 = inlined_call_operand.vmem [shape: f32[32,4], index: 1, kind: input, shape index: {}]
  %s2 = inlined_call_operand.vmem [shape: f32[1,4], index: 2, kind: input, shape index: {}]
  %s3 = inlined_call_operand.vmem [shape: f32[32,32], index: 3, kind: input, shape index: {}]
  %s4 = inlined_call_operand.vmem [shape: f32[1,32], index: 4, kind: input, shape index: {}]
  %s5 = inlined_call_operand.vmem [shape: f32[1,4], index: 5, kind: input, shape index: {}]
  %s6 = inlined_call_operand.vmem [shape: f32[1,32], index: 6, kind: input, shape index: {}]
  %s7 = inlined_call_operand.vmem [shape: f32[4,32], index: 7, kind: input, shape index: {}]
  %s8 = inlined_call_operand.vmem [shape: f32[32,128], index: 8, kind: input, shape index: {}]
  %s9 = inlined_call_operand.vmem [shape: f32[1,128], index: 9, kind: input, shape index: {}]
  %s10 = inlined_call_operand.hbm [shape: f32[2,128], index: 10, kind: output, shape index: {}]
  %s11 = sld [smem:[#allocation0]]
  $region50: #{mha_classifier.1} parent=0
    _
  %s13 = ssub.s32 1, %s11
  %s14 = scalar_select 0, %s13, %s11
  $region1: #{mha_classifier.1} parent=0
    #allocation2 [shape = 'u8[1024]{0}', space=vmem, size = 0x400, scoped, tag = 'output window, operand 0, single buffered']
    #allocation3 [shape = 's32[1]{0}', space=sflag, size = 0x4, scoped, tag = 'scoped memory for mha_classifier.1']
    %15 = vsyncpa [#allocation3], 0
    // Predicated region
    $region2: #{mha_classifier.1} parent=1 // pred_check
      _
    $region3: #{mha_classifier.1} parent=1 // pred_check_branch
      %17 = sbr.rel (0) target = $region5
    $region4: #{mha_classifier.1} parent=1 // pred_region
      _
    $region5: #{mha_classifier.1} parent=1 // pred_fallthru
      _
    // Predicated region
    $region6: #{mha_classifier.1} parent=1 // pred_check
      _
    $region7: #{mha_classifier.1} parent=1 // pred_check_branch
      %19 = sbr.rel (0) target = $region9
    $region8: #{mha_classifier.1} parent=1 // pred_region
      _
    $region9: #{mha_classifier.1} parent=1 // pred_fallthru
      _
    // Predicated region
    $region10: #{mha_classifier.1} parent=1 // pred_check
      _
    $region11: #{mha_classifier.1} parent=1 // pred_check_branch
      %21 = sbr.rel (0) target = $region13
    $region12: #{mha_classifier.1} parent=1 // pred_region
      _
    $region13: #{mha_classifier.1} parent=1 // pred_fallthru
      _
    // Predicated region
    $region14: #{mha_classifier.1} parent=1 // pred_check
      _
    $region15: #{mha_classifier.1} parent=1 // pred_check_branch
      %23 = sbr.rel (0) target = $region17
    $region16: #{mha_classifier.1} parent=1 // pred_region
      _
    $region17: #{mha_classifier.1} parent=1 // pred_fallthru
      _
    // Predicated region
    $region18: #{mha_classifier.1} parent=1 // pred_check
      _
    $region19: #{mha_classifier.1} parent=1 // pred_check_branch
      %25 = sbr.rel (0) target = $region21
    $region20: #{mha_classifier.1} parent=1 // pred_region
      _
    $region21: #{mha_classifier.1} parent=1 // pred_fallthru
      _
    // Predicated region
    $region22: #{mha_classifier.1} parent=1 // pred_check
      _
    $region23: #{mha_classifier.1} parent=1 // pred_check_branch
      %27 = sbr.rel (0) target = $region25
    $region24: #{mha_classifier.1} parent=1 // pred_region
      _
    $region25: #{mha_classifier.1} parent=1 // pred_fallthru
      _
    // Predicated region
    $region26: #{mha_classifier.1} parent=1 // pred_check
      _
    $region27: #{mha_classifier.1} parent=1 // pred_check_branch
      %29 = sbr.rel (0) target = $region29
    $region28: #{mha_classifier.1} parent=1 // pred_region
      _
    $region29: #{mha_classifier.1} parent=1 // pred_fallthru
      _
    // Predicated region
    $region30: #{mha_classifier.1} parent=1 // pred_check
      _
    $region31: #{mha_classifier.1} parent=1 // pred_check_branch
      %31 = sbr.rel (0) target = $region33
    $region32: #{mha_classifier.1} parent=1 // pred_region
      _
    $region33: #{mha_classifier.1} parent=1 // pred_fallthru
      _
    // Predicated region
    $region34: #{mha_classifier.1} parent=1 // pred_check
      _
    $region35: #{mha_classifier.1} parent=1 // pred_check_branch
      %33 = sbr.rel (0) target = $region37
    $region36: #{mha_classifier.1} parent=1 // pred_region
      _
    $region37: #{mha_classifier.1} parent=1 // pred_fallthru
      _
    // Predicated region
    $region38: #{mha_classifier.1} parent=1 // pred_check
      _
    $region39: #{mha_classifier.1} parent=1 // pred_check_branch
      %35 = sbr.rel (0) target = $region41
    $region40: #{mha_classifier.1} parent=1 // pred_region
      _
    $region41: #{mha_classifier.1} parent=1 // pred_fallthru
      _
    %v36 = vld [vmem:[%s0] sm:$0xff]
    %v37 = vld [vmem:[%s0 + $0x8] sm:$0xff]
    %v38 = vld [vmem:[%s1] sm:$0xff]
    %v39 = vld [vmem:[%s1 + $0x8] sm:$0xff]
    %v40 = vld [vmem:[%s1 + $0x10] sm:$0xff]
    %v41 = vld [vmem:[%s1 + $0x18] sm:$0xff]
    %v42 = vld [vmem:[%s2] sm:$0x1]
    %v44 = vlaneseq
    %v45 = vshrl.u32 %v44, 7
    %v46 = vsub.s32 0, %v45
    %v47 = vrot.slane %v42, %v46
    %vm49 = vcmask 261120
    %v51 = vsel %vm49, %v36, 0
    %v54 = vsel %vm49, %v37, 0
    %56 = vmatprep.subr.mxu0 0.0
    %57 = vmatpush1.msra.mxu0 %v38
    %58 = vmatprep.subr.mxu0 0.0
    %59 = vmatpush1.msra.mxu0 %v39
    %60 = vmatprep.subr.mxu0 0.0
    %61 = vmatpush1.msra.mxu0 %v40
    %62 = vmatprep.subr.mxu0 0.0
    %63 = vmatpush1.msra.mxu0 %v41
    %64 = vmatprep.subr.mxu0 0.0
    %65 = vmatpush1.msra.mxu0 0.0
    %66 = vmatprep.subr.mxu0 0.0
    %67 = vmatpush1.msra.mxu0 0.0
    %68 = vmatprep.subr.mxu0 0.0
    %69 = vmatpush1.msra.mxu0 0.0
    %70 = vmatprep.subr.mxu0 0.0
    %71 = vmatpush1.msra.mxu0 0.0
    %72 = vmatprep.subr.mxu0 0.0
    %73 = vmatpush1.msra.mxu0 0.0
    %74 = vmatprep.subr.mxu0 0.0
    %75 = vmatpush1.msra.mxu0 0.0
    %76 = vmatprep.subr.mxu0 0.0
    %77 = vmatpush1.msra.mxu0 0.0
    %78 = vmatprep.subr.mxu0 0.0
    %79 = vmatpush1.msra.mxu0 0.0
    %80 = vmatprep.subr.mxu0 0.0
    %81 = vmatpush1.msra.mxu0 0.0
    %82 = vmatprep.subr.mxu0 0.0
    %83 = vmatpush1.msra.mxu0 0.0
    %84 = vmatprep.subr.mxu0 0.0
    %85 = vmatpush1.msra.mxu0 0.0
    %86 = vmatprep.subr.mxu0 0.0
    %87 = vmatpush1.msra.mxu0 0.0
    %88 = vmatprep.subr.mxu0 0.0
    %89 = vmatpush1.msra.mxu0 0.0
    %90 = vmatprep.subr.mxu0 0.0
    %91 = vmatpush1.msra.mxu0 0.0
    %92 = vmatprep.subr.mxu0 0.0
    %93 = vmatpush1.msra.mxu0 0.0
    %94 = vmatprep.subr.mxu0 0.0
    %95 = vmatpush1.msra.mxu0 0.0
    %96 = vmatprep.subr.mxu0 0.0
    %97 = vmatpush1.msra.mxu0 0.0
    %98 = vmatprep.subr.mxu0 0.0
    %99 = vmatpush1.msra.mxu0 0.0
    %100 = vmatprep.subr.mxu0 0.0
    %101 = vmatpush1.msra.mxu0 0.0
    %102 = vmatprep.subr.mxu0 0.0
    %103 = vmatpush1.msra.mxu0 0.0
    %104 = vmatprep.subr.mxu0 0.0
    %105 = vmatpush1.msra.mxu0 0.0
    %106 = vmatprep.subr.mxu0 0.0
    %107 = vmatpush1.msra.mxu0 0.0
    %108 = vmatprep.subr.mxu0 0.0
    %109 = vmatpush1.msra.mxu0 0.0
    %110 = vmatprep.subr.mxu0 0.0
    %111 = vmatpush1.msra.mxu0 0.0
    %112 = vmatprep.subr.mxu0 0.0
    %113 = vmatpush1.msra.mxu0 0.0
    %114 = vmatprep.subr.mxu0 0.0
    %115 = vmatpush1.msra.mxu0 0.0
    %116 = vmatprep.subr.mxu0 0.0
    %117 = vmatpush1.msra.mxu0 0.0
    %118 = vmatprep.subr.mxu0 0.0
    %119 = vmatpush1.msra.mxu0 0.0
    %120 = vmatprep.mubr.f32.mxu0 0.0
    %121 = vmatmul.mubr.f32.gmra.mrb[0].mxu0 %v51
    %v122 = vpop.f32.mrb[0].mxu0
    %v123 = vadd.f32 %v47, %v122
    %v124 = vpop.f32.mrb[0].mxu0
    %125 = vmatprep.mubr.f32.mxu0 0.0
    %126 = vmatmul.mubr.f32.gmra.mrb[0].mxu0 %v54
    %v127 = vpop.f32.mrb[0].mxu0
    %v128 = vadd.f32 %v47, %v127
    %v129 = vpop.f32.mrb[0].mxu0
    %130 = vdwg.mxu0
    %v131 = vld [vmem:[%s3] sm:$0xff]
    %v132 = vld [vmem:[%s3 + $0x8] sm:$0xff]
    %v133 = vld [vmem:[%s3 + $0x10] sm:$0xff]
    %v134 = vld [vmem:[%s3 + $0x18] sm:$0xff]
    %v135 = vld [vmem:[%s4] sm:$0x1]
    %v137 = vlaneseq
    %v138 = vshrl.u32 %v137, 7
    %v139 = vsub.s32 0, %v138
    %v140 = vrot.slane %v135, %v139
    %142 = vmatprep.subr.mxu0 0.0
    %143 = vmatpush1.msra.mxu0 %v131
    %144 = vmatprep.subr.mxu0 0.0
    %145 = vmatpush1.msra.mxu0 %v132
    %146 = vmatprep.subr.mxu0 0.0
    %147 = vmatpush1.msra.mxu0 %v133
    %148 = vmatprep.subr.mxu0 0.0
    %149 = vmatpush1.msra.mxu0 %v134
    %150 = vmatprep.subr.mxu0 0.0
    %151 = vmatpush1.msra.mxu0 0.0
    %152 = vmatprep.subr.mxu0 0.0
    %153 = vmatpush1.msra.mxu0 0.0
    %154 = vmatprep.subr.mxu0 0.0
    %155 = vmatpush1.msra.mxu0 0.0
    %156 = vmatprep.subr.mxu0 0.0
    %157 = vmatpush1.msra.mxu0 0.0
    %158 = vmatprep.subr.mxu0 0.0
    %159 = vmatpush1.msra.mxu0 0.0
    %160 = vmatprep.subr.mxu0 0.0
    %161 = vmatpush1.msra.mxu0 0.0
    %162 = vmatprep.subr.mxu0 0.0
    %163 = vmatpush1.msra.mxu0 0.0
    %164 = vmatprep.subr.mxu0 0.0
    %165 = vmatpush1.msra.mxu0 0.0
    %166 = vmatprep.subr.mxu0 0.0
    %167 = vmatpush1.msra.mxu0 0.0
    %168 = vmatprep.subr.mxu0 0.0
    %169 = vmatpush1.msra.mxu0 0.0
    %170 = vmatprep.subr.mxu0 0.0
    %171 = vmatpush1.msra.mxu0 0.0
    %172 = vmatprep.subr.mxu0 0.0
    %173 = vmatpush1.msra.mxu0 0.0
    %174 = vmatprep.subr.mxu0 0.0
    %175 = vmatpush1.msra.mxu0 0.0
    %176 = vmatprep.subr.mxu0 0.0
    %177 = vmatpush1.msra.mxu0 0.0
    %178 = vmatprep.subr.mxu0 0.0
    %179 = vmatpush1.msra.mxu0 0.0
    %180 = vmatprep.subr.mxu0 0.0
    %181 = vmatpush1.msra.mxu0 0.0
    %182 = vmatprep.subr.mxu0 0.0
    %183 = vmatpush1.msra.mxu0 0.0
    %184 = vmatprep.subr.mxu0 0.0
    %185 = vmatpush1.msra.mxu0 0.0
    %186 = vmatprep.subr.mxu0 0.0
    %187 = vmatpush1.msra.mxu0 0.0
    %188 = vmatprep.subr.mxu0 0.0
    %189 = vmatpush1.msra.mxu0 0.0
    %190 = vmatprep.subr.mxu0 0.0
    %191 = vmatpush1.msra.mxu0 0.0
    %192 = vmatprep.subr.mxu0 0.0
    %193 = vmatpush1.msra.mxu0 0.0
    %194 = vmatprep.subr.mxu0 0.0
    %195 = vmatpush1.msra.mxu0 0.0
    %196 = vmatprep.subr.mxu0 0.0
    %197 = vmatpush1.msra.mxu0 0.0
    %198 = vmatprep.subr.mxu0 0.0
    %199 = vmatpush1.msra.mxu0 0.0
    %200 = vmatprep.subr.mxu0 0.0
    %201 = vmatpush1.msra.mxu0 0.0
    %202 = vmatprep.subr.mxu0 0.0
    %203 = vmatpush1.msra.mxu0 0.0
    %204 = vmatprep.subr.mxu0 0.0
    %205 = vmatpush1.msra.mxu0 0.0
    %206 = vmatprep.mubr.f32.mxu0 0.0
    %207 = vmatmul.mubr.f32.gmra.mrb[0].mxu0 %v51
    %v208 = vpop.f32.mrb[0].mxu0
    %v209 = vadd.f32 %v140, %v208
    %v210 = vpop.f32.mrb[0].mxu0
    %211 = vmatprep.mubr.f32.mxu0 0.0
    %212 = vmatmul.mubr.f32.gmra.mrb[0].mxu0 %v54
    %v213 = vpop.f32.mrb[0].mxu0
    %v214 = vadd.f32 %v140, %v213
    %v215 = vpop.f32.mrb[0].mxu0
    %216 = vdwg.mxu0
    %v217 = vld [vmem:[%s5] sm:$0x1]
    %v218 = vld [vmem:[%s6] sm:$0x1]
    %v219 = vld [vmem:[%s7] sm:$0xf]
    %vm220 = vcmask 31744
    %v221 = vsel %vm220, %v123, -inf
    %v222 = vrot.slane %v221, 4
    %v223 = vmax.f32 %v221, %v222
    %v224 = vrot.slane %v223, 2
    %v225 = vmax.f32 %v223, %v224
    %v226 = vrot.slane %v225, 1
    %v227 = vmax.f32 %v225, %v226
    %v228 = vmax.f32 %v227, %v217
    %v229 = vlaneseq
    %v230 = vshrl.u32 %v229, 7
    %v231 = vsub.s32 0, %v230
    %v232 = vrot.slane %v228, %v231
    %v233 = vsub.f32 %v123, %v232
    %v234 = vmul.f32 %v233, 1.442695
    %v235 = vpow.pop %v234
    %v236 = vsub.f32 %v217, %v228
    %v237 = vmul.f32 %v236, 1.442695
    %v238 = vpow.pop %v237
    %v239 = vsel %vm220, %v235, 0.0
    %v240 = vrot.slane %v239, 4
    %v241 = vadd.f32 %v239, %v240
    %v242 = vrot.slane %v241, 2
    %v243 = vadd.f32 %v241, %v242
    %v244 = vrot.slane %v243, 1
    %v245 = vadd.f32 %v243, %v244
    %v246 = vadd.f32 %v245, %v238
    %v247 = vrcp.pop %v246
    %v248 = vlaneseq
    %v249 = vshrl.u32 %v248, 7
    %v250 = vsub.s32 0, %v249
    %v251 = vrot.slane %v247, %v250
    %v252 = vmul.f32 %v235, %v251
    %v253 = vmul.f32 %v238, %v247
    %v255 = vsel %vm220, %v252, 0
    %vm257 = vcmask 1043456
    %v259 = vsel %vm257, %v219, 0
    %261 = vmatprep.subr.mxu0 0.0
    %262 = vmatpush1.msra.mxu0 %v259
    %263 = vmatprep.subr.mxu0 0.0
    %264 = vmatpush1.msra.mxu0 0.0
    %265 = vmatprep.subr.mxu0 0.0
    %266 = vmatpush1.msra.mxu0 0.0
    %267 = vmatprep.subr.mxu0 0.0
    %268 = vmatpush1.msra.mxu0 0.0
    %269 = vmatprep.subr.mxu0 0.0
    %270 = vmatpush1.msra.mxu0 0.0
    %271 = vmatprep.subr.mxu0 0.0
    %272 = vmatpush1.msra.mxu0 0.0
    %273 = vmatprep.subr.mxu0 0.0
    %274 = vmatpush1.msra.mxu0 0.0
    %275 = vmatprep.subr.mxu0 0.0
    %276 = vmatpush1.msra.mxu0 0.0
    %277 = vmatprep.subr.mxu0 0.0
    %278 = vmatpush1.msra.mxu0 0.0
    %279 = vmatprep.subr.mxu0 0.0
    %280 = vmatpush1.msra.mxu0 0.0
    %281 = vmatprep.subr.mxu0 0.0
    %282 = vmatpush1.msra.mxu0 0.0
    %283 = vmatprep.subr.mxu0 0.0
    %284 = vmatpush1.msra.mxu0 0.0
    %285 = vmatprep.subr.mxu0 0.0
    %286 = vmatpush1.msra.mxu0 0.0
    %287 = vmatprep.subr.mxu0 0.0
    %288 = vmatpush1.msra.mxu0 0.0
    %289 = vmatprep.subr.mxu0 0.0
    %290 = vmatpush1.msra.mxu0 0.0
    %291 = vmatprep.subr.mxu0 0.0
    %292 = vmatpush1.msra.mxu0 0.0
    %293 = vmatprep.subr.mxu0 0.0
    %294 = vmatpush1.msra.mxu0 0.0
    %295 = vmatprep.subr.mxu0 0.0
    %296 = vmatpush1.msra.mxu0 0.0
    %297 = vmatprep.subr.mxu0 0.0
    %298 = vmatpush1.msra.mxu0 0.0
    %299 = vmatprep.subr.mxu0 0.0
    %300 = vmatpush1.msra.mxu0 0.0
    %301 = vmatprep.subr.mxu0 0.0
    %302 = vmatpush1.msra.mxu0 0.0
    %303 = vmatprep.subr.mxu0 0.0
    %304 = vmatpush1.msra.mxu0 0.0
    %305 = vmatprep.subr.mxu0 0.0
    %306 = vmatpush1.msra.mxu0 0.0
    %307 = vmatprep.subr.mxu0 0.0
    %308 = vmatpush1.msra.mxu0 0.0
    %309 = vmatprep.subr.mxu0 0.0
    %310 = vmatpush1.msra.mxu0 0.0
    %311 = vmatprep.subr.mxu0 0.0
    %312 = vmatpush1.msra.mxu0 0.0
    %313 = vmatprep.subr.mxu0 0.0
    %314 = vmatpush1.msra.mxu0 0.0
    %315 = vmatprep.subr.mxu0 0.0
    %316 = vmatpush1.msra.mxu0 0.0
    %317 = vmatprep.subr.mxu0 0.0
    %318 = vmatpush1.msra.mxu0 0.0
    %319 = vmatprep.subr.mxu0 0.0
    %320 = vmatpush1.msra.mxu0 0.0
    %321 = vmatprep.subr.mxu0 0.0
    %322 = vmatpush1.msra.mxu0 0.0
    %323 = vmatprep.subr.mxu0 0.0
    %324 = vmatpush1.msra.mxu0 0.0
    %325 = vmatprep.mubr.f32.mxu0 0.0
    %326 = vmatmul.mubr.f32.gmra.mrb[0].mxu0 %v255
    %v327 = vpop.f32.mrb[0].mxu0
    %v328 = vadd.f32 0.0, %v327
    %v329 = vpop.f32.mrb[0].mxu0
    %330 = vdwg.mxu0
    %v331 = vmul.f32 %v328, %v209
    %v332 = vsel %vm49, %v331, 0.0
    %v333 = vrot.slane %v332, 4
    %v334 = vadd.f32 %v332, %v333
    %v335 = vrot.slane %v334, 2
    %v336 = vadd.f32 %v334, %v335
    %v337 = vrot.slane %v336, 1
    %v338 = vadd.f32 %v336, %v337
    %v340 = vsel %vm220, %v253, 0
    %342 = vmatprep.subr.mxu0 0.0
    %343 = vmatpush1.msra.mxu0 %v259
    %344 = vmatprep.subr.mxu0 0.0
    %345 = vmatpush1.msra.mxu0 0.0
    %346 = vmatprep.subr.mxu0 0.0
    %347 = vmatpush1.msra.mxu0 0.0
    %348 = vmatprep.subr.mxu0 0.0
    %349 = vmatpush1.msra.mxu0 0.0
    %350 = vmatprep.subr.mxu0 0.0
    %351 = vmatpush1.msra.mxu0 0.0
    %352 = vmatprep.subr.mxu0 0.0
    %353 = vmatpush1.msra.mxu0 0.0
    %354 = vmatprep.subr.mxu0 0.0
    %355 = vmatpush1.msra.mxu0 0.0
    %356 = vmatprep.subr.mxu0 0.0
    %357 = vmatpush1.msra.mxu0 0.0
    %358 = vmatprep.subr.mxu0 0.0
    %359 = vmatpush1.msra.mxu0 0.0
    %360 = vmatprep.subr.mxu0 0.0
    %361 = vmatpush1.msra.mxu0 0.0
    %362 = vmatprep.subr.mxu0 0.0
    %363 = vmatpush1.msra.mxu0 0.0
    %364 = vmatprep.subr.mxu0 0.0
    %365 = vmatpush1.msra.mxu0 0.0
    %366 = vmatprep.subr.mxu0 0.0
    %367 = vmatpush1.msra.mxu0 0.0
    %368 = vmatprep.subr.mxu0 0.0
    %369 = vmatpush1.msra.mxu0 0.0
    %370 = vmatprep.subr.mxu0 0.0
    %371 = vmatpush1.msra.mxu0 0.0
    %372 = vmatprep.subr.mxu0 0.0
    %373 = vmatpush1.msra.mxu0 0.0
    %374 = vmatprep.subr.mxu0 0.0
    %375 = vmatpush1.msra.mxu0 0.0
    %376 = vmatprep.subr.mxu0 0.0
    %377 = vmatpush1.msra.mxu0 0.0
    %378 = vmatprep.subr.mxu0 0.0
    %379 = vmatpush1.msra.mxu0 0.0
    %380 = vmatprep.subr.mxu0 0.0
    %381 = vmatpush1.msra.mxu0 0.0
    %382 = vmatprep.subr.mxu0 0.0
    %383 = vmatpush1.msra.mxu0 0.0
    %384 = vmatprep.subr.mxu0 0.0
    %385 = vmatpush1.msra.mxu0 0.0
    %386 = vmatprep.subr.mxu0 0.0
    %387 = vmatpush1.msra.mxu0 0.0
    %388 = vmatprep.subr.mxu0 0.0
    %389 = vmatpush1.msra.mxu0 0.0
    %390 = vmatprep.subr.mxu0 0.0
    %391 = vmatpush1.msra.mxu0 0.0
    %392 = vmatprep.subr.mxu0 0.0
    %393 = vmatpush1.msra.mxu0 0.0
    %394 = vmatprep.subr.mxu0 0.0
    %395 = vmatpush1.msra.mxu0 0.0
    %396 = vmatprep.subr.mxu0 0.0
    %397 = vmatpush1.msra.mxu0 0.0
    %398 = vmatprep.subr.mxu0 0.0
    %399 = vmatpush1.msra.mxu0 0.0
    %400 = vmatprep.subr.mxu0 0.0
    %401 = vmatpush1.msra.mxu0 0.0
    %402 = vmatprep.subr.mxu0 0.0
    %403 = vmatpush1.msra.mxu0 0.0
    %404 = vmatprep.subr.mxu0 0.0
    %405 = vmatpush1.msra.mxu0 0.0
    %406 = vmatprep.mubr.f32.mxu0 0.0
    %407 = vmatmul.mubr.f32.gmra.mrb[0].mxu0 %v340
    %v408 = vpop.f32.mrb[0].mxu0
    %v409 = vadd.f32 0.0, %v408
    %v410 = vpop.f32.mrb[0].mxu0
    %411 = vdwg.mxu0
    %v412 = vmul.f32 %v409, %v218
    %v413 = vadd.f32 %v338, %v412
    %v414 = vsel %vm220, %v128, -inf
    %v415 = vrot.slane %v414, 4
    %v416 = vmax.f32 %v414, %v415
    %v417 = vrot.slane %v416, 2
    %v418 = vmax.f32 %v416, %v417
    %v419 = vrot.slane %v418, 1
    %v420 = vmax.f32 %v418, %v419
    %v421 = vmax.f32 %v420, %v217
    %v422 = vlaneseq
    %v423 = vshrl.u32 %v422, 7
    %v424 = vsub.s32 0, %v423
    %v425 = vrot.slane %v421, %v424
    %v426 = vsub.f32 %v128, %v425
    %v427 = vmul.f32 %v426, 1.442695
    %v428 = vpow.pop %v427
    %v429 = vsub.f32 %v217, %v421
    %v430 = vmul.f32 %v429, 1.442695
    %v431 = vpow.pop %v430
    %v432 = vsel %vm220, %v428, 0.0
    %v433 = vrot.slane %v432, 4
    %v434 = vadd.f32 %v432, %v433
    %v435 = vrot.slane %v434, 2
    %v436 = vadd.f32 %v434, %v435
    %v437 = vrot.slane %v436, 1
    %v438 = vadd.f32 %v436, %v437
    %v439 = vadd.f32 %v438, %v431
    %v440 = vrcp.pop %v439
    %v441 = vlaneseq
    %v442 = vshrl.u32 %v441, 7
    %v443 = vsub.s32 0, %v442
    %v444 = vrot.slane %v440, %v443
    %v445 = vmul.f32 %v428, %v444
    %v446 = vmul.f32 %v431, %v440
    %v448 = vsel %vm220, %v445, 0
    %450 = vmatprep.subr.mxu0 0.0
    %451 = vmatpush1.msra.mxu0 %v259
    %452 = vmatprep.subr.mxu0 0.0
    %453 = vmatpush1.msra.mxu0 0.0
    %454 = vmatprep.subr.mxu0 0.0
    %455 = vmatpush1.msra.mxu0 0.0
    %456 = vmatprep.subr.mxu0 0.0
    %457 = vmatpush1.msra.mxu0 0.0
    %458 = vmatprep.subr.mxu0 0.0
    %459 = vmatpush1.msra.mxu0 0.0
    %460 = vmatprep.subr.mxu0 0.0
    %461 = vmatpush1.msra.mxu0 0.0
    %462 = vmatprep.subr.mxu0 0.0
    %463 = vmatpush1.msra.mxu0 0.0
    %464 = vmatprep.subr.mxu0 0.0
    %465 = vmatpush1.msra.mxu0 0.0
    %466 = vmatprep.subr.mxu0 0.0
    %467 = vmatpush1.msra.mxu0 0.0
    %468 = vmatprep.subr.mxu0 0.0
    %469 = vmatpush1.msra.mxu0 0.0
    %470 = vmatprep.subr.mxu0 0.0
    %471 = vmatpush1.msra.mxu0 0.0
    %472 = vmatprep.subr.mxu0 0.0
    %473 = vmatpush1.msra.mxu0 0.0
    %474 = vmatprep.subr.mxu0 0.0
    %475 = vmatpush1.msra.mxu0 0.0
    %476 = vmatprep.subr.mxu0 0.0
    %477 = vmatpush1.msra.mxu0 0.0
    %478 = vmatprep.subr.mxu0 0.0
    %479 = vmatpush1.msra.mxu0 0.0
    %480 = vmatprep.subr.mxu0 0.0
    %481 = vmatpush1.msra.mxu0 0.0
    %482 = vmatprep.subr.mxu0 0.0
    %483 = vmatpush1.msra.mxu0 0.0
    %484 = vmatprep.subr.mxu0 0.0
    %485 = vmatpush1.msra.mxu0 0.0
    %486 = vmatprep.subr.mxu0 0.0
    %487 = vmatpush1.msra.mxu0 0.0
    %488 = vmatprep.subr.mxu0 0.0
    %489 = vmatpush1.msra.mxu0 0.0
    %490 = vmatprep.subr.mxu0 0.0
    %491 = vmatpush1.msra.mxu0 0.0
    %492 = vmatprep.subr.mxu0 0.0
    %493 = vmatpush1.msra.mxu0 0.0
    %494 = vmatprep.subr.mxu0 0.0
    %495 = vmatpush1.msra.mxu0 0.0
    %496 = vmatprep.subr.mxu0 0.0
    %497 = vmatpush1.msra.mxu0 0.0
    %498 = vmatprep.subr.mxu0 0.0
    %499 = vmatpush1.msra.mxu0 0.0
    %500 = vmatprep.subr.mxu0 0.0
    %501 = vmatpush1.msra.mxu0 0.0
    %502 = vmatprep.subr.mxu0 0.0
    %503 = vmatpush1.msra.mxu0 0.0
    %504 = vmatprep.subr.mxu0 0.0
    %505 = vmatpush1.msra.mxu0 0.0
    %506 = vmatprep.subr.mxu0 0.0
    %507 = vmatpush1.msra.mxu0 0.0
    %508 = vmatprep.subr.mxu0 0.0
    %509 = vmatpush1.msra.mxu0 0.0
    %510 = vmatprep.subr.mxu0 0.0
    %511 = vmatpush1.msra.mxu0 0.0
    %512 = vmatprep.subr.mxu0 0.0
    %513 = vmatpush1.msra.mxu0 0.0
    %514 = vmatprep.mubr.f32.mxu0 0.0
    %515 = vmatmul.mubr.f32.gmra.mrb[0].mxu0 %v448
    %v516 = vpop.f32.mrb[0].mxu0
    %v517 = vadd.f32 0.0, %v516
    %v518 = vpop.f32.mrb[0].mxu0
    %519 = vdwg.mxu0
    %v520 = vmul.f32 %v517, %v214
    %v521 = vsel %vm49, %v520, 0.0
    %v522 = vrot.slane %v521, 4
    %v523 = vadd.f32 %v521, %v522
    %v524 = vrot.slane %v523, 2
    %v525 = vadd.f32 %v523, %v524
    %v526 = vrot.slane %v525, 1
    %v527 = vadd.f32 %v525, %v526
    %v529 = vsel %vm220, %v446, 0
    %531 = vmatprep.subr.mxu0 0.0
    %532 = vmatpush1.msra.mxu0 %v259
    %533 = vmatprep.subr.mxu0 0.0
    %534 = vmatpush1.msra.mxu0 0.0
    %535 = vmatprep.subr.mxu0 0.0
    %536 = vmatpush1.msra.mxu0 0.0
    %537 = vmatprep.subr.mxu0 0.0
    %538 = vmatpush1.msra.mxu0 0.0
    %539 = vmatprep.subr.mxu0 0.0
    %540 = vmatpush1.msra.mxu0 0.0
    %541 = vmatprep.subr.mxu0 0.0
    %542 = vmatpush1.msra.mxu0 0.0
    %543 = vmatprep.subr.mxu0 0.0
    %544 = vmatpush1.msra.mxu0 0.0
    %545 = vmatprep.subr.mxu0 0.0
    %546 = vmatpush1.msra.mxu0 0.0
    %547 = vmatprep.subr.mxu0 0.0
    %548 = vmatpush1.msra.mxu0 0.0
    %549 = vmatprep.subr.mxu0 0.0
    %550 = vmatpush1.msra.mxu0 0.0
    %551 = vmatprep.subr.mxu0 0.0
    %552 = vmatpush1.msra.mxu0 0.0
    %553 = vmatprep.subr.mxu0 0.0
    %554 = vmatpush1.msra.mxu0 0.0
    %555 = vmatprep.subr.mxu0 0.0
    %556 = vmatpush1.msra.mxu0 0.0
    %557 = vmatprep.subr.mxu0 0.0
    %558 = vmatpush1.msra.mxu0 0.0
    %559 = vmatprep.subr.mxu0 0.0
    %560 = vmatpush1.msra.mxu0 0.0
    %561 = vmatprep.subr.mxu0 0.0
    %562 = vmatpush1.msra.mxu0 0.0
    %563 = vmatprep.subr.mxu0 0.0
    %564 = vmatpush1.msra.mxu0 0.0
    %565 = vmatprep.subr.mxu0 0.0
    %566 = vmatpush1.msra.mxu0 0.0
    %567 = vmatprep.subr.mxu0 0.0
    %568 = vmatpush1.msra.mxu0 0.0
    %569 = vmatprep.subr.mxu0 0.0
    %570 = vmatpush1.msra.mxu0 0.0
    %571 = vmatprep.subr.mxu0 0.0
    %572 = vmatpush1.msra.mxu0 0.0
    %573 = vmatprep.subr.mxu0 0.0
    %574 = vmatpush1.msra.mxu0 0.0
    %575 = vmatprep.subr.mxu0 0.0
    %576 = vmatpush1.msra.mxu0 0.0
    %577 = vmatprep.subr.mxu0 0.0
    %578 = vmatpush1.msra.mxu0 0.0
    %579 = vmatprep.subr.mxu0 0.0
    %580 = vmatpush1.msra.mxu0 0.0
    %581 = vmatprep.subr.mxu0 0.0
    %582 = vmatpush1.msra.mxu0 0.0
    %583 = vmatprep.subr.mxu0 0.0
    %584 = vmatpush1.msra.mxu0 0.0
    %585 = vmatprep.subr.mxu0 0.0
    %586 = vmatpush1.msra.mxu0 0.0
    %587 = vmatprep.subr.mxu0 0.0
    %588 = vmatpush1.msra.mxu0 0.0
    %589 = vmatprep.subr.mxu0 0.0
    %590 = vmatpush1.msra.mxu0 0.0
    %591 = vmatprep.subr.mxu0 0.0
    %592 = vmatpush1.msra.mxu0 0.0
    %593 = vmatprep.subr.mxu0 0.0
    %594 = vmatpush1.msra.mxu0 0.0
    %595 = vmatprep.mubr.f32.mxu0 0.0
    %596 = vmatmul.mubr.f32.gmra.mrb[0].mxu0 %v529
    %v597 = vpop.f32.mrb[0].mxu0
    %v598 = vadd.f32 0.0, %v597
    %v599 = vpop.f32.mrb[0].mxu0
    %600 = vdwg.mxu0
    %v601 = vmul.f32 %v598, %v218
    %v602 = vadd.f32 %v527, %v601
    %v604 = vrot.slane %v602, 7
    %vm606 = vcmask 1040384
    %v607 = vsel %vm606, %v413, %v604
    %v608 = vld [vmem:[%s8] sm:$0xff]
    %v609 = vld [vmem:[%s8 + $0x8] sm:$0xff]
    %v610 = vld [vmem:[%s8 + $0x10] sm:$0xff]
    %v611 = vld [vmem:[%s8 + $0x18] sm:$0xff]
    %v612 = vld [vmem:[%s9] sm:$0x1]
    %v614 = vlaneseq
    %v615 = vshrl.u32 %v614, 7
    %v616 = vsub.s32 0, %v615
    %v617 = vrot.slane %v612, %v616
    %v620 = vsel %vm49, %v607, 0
    %622 = vmatprep.subr.mxu0 0.0
    %623 = vmatpush1.msra.mxu0 %v608
    %624 = vmatprep.subr.mxu0 0.0
    %625 = vmatpush1.msra.mxu0 %v609
    %626 = vmatprep.subr.mxu0 0.0
    %627 = vmatpush1.msra.mxu0 %v610
    %628 = vmatprep.subr.mxu0 0.0
    %629 = vmatpush1.msra.mxu0 %v611
    %630 = vmatprep.subr.mxu0 0.0
    %631 = vmatpush1.msra.mxu0 0.0
    %632 = vmatprep.subr.mxu0 0.0
    %633 = vmatpush1.msra.mxu0 0.0
    %634 = vmatprep.subr.mxu0 0.0
    %635 = vmatpush1.msra.mxu0 0.0
    %636 = vmatprep.subr.mxu0 0.0
    %637 = vmatpush1.msra.mxu0 0.0
    %638 = vmatprep.subr.mxu0 0.0
    %639 = vmatpush1.msra.mxu0 0.0
    %640 = vmatprep.subr.mxu0 0.0
    %641 = vmatpush1.msra.mxu0 0.0
    %642 = vmatprep.subr.mxu0 0.0
    %643 = vmatpush1.msra.mxu0 0.0
    %644 = vmatprep.subr.mxu0 0.0
    %645 = vmatpush1.msra.mxu0 0.0
    %646 = vmatprep.subr.mxu0 0.0
    %647 = vmatpush1.msra.mxu0 0.0
    %648 = vmatprep.subr.mxu0 0.0
    %649 = vmatpush1.msra.mxu0 0.0
    %650 = vmatprep.subr.mxu0 0.0
    %651 = vmatpush1.msra.mxu0 0.0
    %652 = vmatprep.subr.mxu0 0.0
    %653 = vmatpush1.msra.mxu0 0.0
    %654 = vmatprep.subr.mxu0 0.0
    %655 = vmatpush1.msra.mxu0 0.0
    %656 = vmatprep.subr.mxu0 0.0
    %657 = vmatpush1.msra.mxu0 0.0
    %658 = vmatprep.subr.mxu0 0.0
    %659 = vmatpush1.msra.mxu0 0.0
    %660 = vmatprep.subr.mxu0 0.0
    %661 = vmatpush1.msra.mxu0 0.0
    %662 = vmatprep.subr.mxu0 0.0
    %663 = vmatpush1.msra.mxu0 0.0
    %664 = vmatprep.subr.mxu0 0.0
    %665 = vmatpush1.msra.mxu0 0.0
    %666 = vmatprep.subr.mxu0 0.0
    %667 = vmatpush1.msra.mxu0 0.0
    %668 = vmatprep.subr.mxu0 0.0
    %669 = vmatpush1.msra.mxu0 0.0
    %670 = vmatprep.subr.mxu0 0.0
    %671 = vmatpush1.msra.mxu0 0.0
    %672 = vmatprep.subr.mxu0 0.0
    %673 = vmatpush1.msra.mxu0 0.0
    %674 = vmatprep.subr.mxu0 0.0
    %675 = vmatpush1.msra.mxu0 0.0
    %676 = vmatprep.subr.mxu0 0.0
    %677 = vmatpush1.msra.mxu0 0.0
    %678 = vmatprep.subr.mxu0 0.0
    %679 = vmatpush1.msra.mxu0 0.0
    %680 = vmatprep.subr.mxu0 0.0
    %681 = vmatpush1.msra.mxu0 0.0
    %682 = vmatprep.subr.mxu0 0.0
    %683 = vmatpush1.msra.mxu0 0.0
    %684 = vmatprep.subr.mxu0 0.0
    %685 = vmatpush1.msra.mxu0 0.0
    %686 = vmatprep.mubr.f32.mxu0 0.0
    %687 = vmatmul.mubr.f32.gmra.mrb[0].mxu0 %v620
    %v688 = vpop.f32.mrb[0].mxu0
    %v689 = vadd.f32 %v617, %v688
    %v690 = vpop.f32.mrb[0].mxu0
    %691 = vdwg.mxu0
    %692 = vst [vmem:[#allocation2] sm:$0x3] %v689
    // Predicated region
    $region42: #{mha_classifier.1} parent=1 // pred_check
      _
    $region43: #{mha_classifier.1} parent=1 // pred_check_branch
      %694 = sbr.rel (0) target = $region45
    $region44: #{mha_classifier.1} parent=1 // pred_region
      %s696 = ssub.s32 32, 32
      %697 = vsyncadd [#allocation3], %s696
      %s699 = sshll.u32 [#allocation2], 4
      %s700 = int_to_ptr.vmem [resolvable:$true] %s699
      %702 = dma.vmem_to_hbm [thread:$0]  %s700, 32, %s10, [#allocation3]
    $region45: #{mha_classifier.1} parent=1 // pred_fallthru
      _
    // Predicated region
    $region46: #{mha_classifier.1} parent=1 // pred_check
      _
    $region47: #{mha_classifier.1} parent=1 // pred_check_branch
      %704 = sbr.rel (0) target = $region49
    $region48: #{mha_classifier.1} parent=1 // pred_region
      %705 = dma.done [#allocation3], 32
    $region49: #{mha_classifier.1} parent=1 // pred_fallthru
      _
    %706 = vsyncpa [#allocation3], 1

</llo_original>
